<compile_context>
chip_gen: v7x
topology: tpu7x:2x2x1
jax: 0.10.0
libtpu: 0.0.40
codegen_flags: <defaults>
</compile_context>

<pallas_src>
import functools

import jax
import jax.numpy as jnp
from jax.experimental import pallas as pl
from jax.experimental.pallas import tpu as pltpu


def _round_up(a, m):
    return (a + m - 1) // m * m


def _make_attention_kernel(n_total, n_tile, b_tile, fx):
    mask_tail = (n_total % n_tile) != 0

    def kernel(xaT_ref, rT_ref, idx_ref, wx_ref, wr_ref, out_ref, iota_ref):
        # xaT_ref: [Fx+1, n_tile]   x^T with a trailing row of ones
        # rT_ref:  [Fr,   n_tile]   ref^T
        # idx_ref: [n_tile, 1]      segment index per node (int32)
        # wx_ref:  [1, Fx+1]        [w_x, bias]  (bias multiplies the ones row)
        # wr_ref:  [1, Fr]          w_ref
        # out_ref: [Fx+1, b_tile]   output^T tile, resident across the N axis;
        #                           row fx accumulates the softmax denominator
        # iota_ref:[n_tile, b_tile] cached lane-iota (VMEM scratch)
        bi = pl.program_id(0)
        ni = pl.program_id(1)

        @pl.when(ni == 0)
        def _init():
            out_ref[...] = jnp.zeros_like(out_ref)
            # Grid-invariant lane-iota; rebuilt once per B tile (ni == 0) instead of
            # every step, and safe under megacore sharding of the parallel bi axis.
            iota_ref[...] = jax.lax.broadcasted_iota(jnp.int32, (n_tile, b_tile), 1)

        xa = xaT_ref[...]                                          # [Fx+1, n_tile]

        # Linear(cat([x, ref], -1)) == [w_x, b] @ [x^T; 1] + w_r @ ref^T  (lane-dense).
        src = jnp.tanh(
            jnp.dot(wx_ref[...], xa, preferred_element_type=jnp.float32)
            + jnp.dot(wr_ref[...], rT_ref[...], preferred_element_type=jnp.float32)
        )                                                          # [1, n_tile]
        # src is tanh-bounded in [-1, 1]; softmax shift-invariance makes the reference
        # max-subtraction unnecessary (exp(src) in [1/e, e] -> no overflow possible).
        e = jnp.exp(src)                                           # [1, n_tile]

        # Weighted, augmented features: rows 0..Fx-1 = e * x^T, row Fx = e (denominator).
        weighted = e * xa                                          # [Fx+1, n_tile]

        if mask_tail:
            # The ragged tail of the last N tile maps to unspecified memory; select to
            # exactly 0 so NaN/Inf garbage never reaches the matmul accumulator.
            node_ids = (jax.lax.broadcasted_iota(jnp.int32, (1, n_tile), 1)
                        + ni * n_tile)                             # [1, n_tile]
            weighted = jnp.where(node_ids < n_total, weighted, 0.0)

        # Segment one-hot, batch axis on lanes: onehot[n, b] = (index[n] == bi*b_tile + b).
        # Offset folded into the skinny [n_tile, 1] index column; full-size work is just
        # the compare + select against the cached lane-iota.
        idx_local = idx_ref[...] - bi * b_tile                     # [n_tile, 1]
        onehot = (iota_ref[...] == idx_local).astype(jnp.float32)  # [n_tile, b_tile]

        # Single MXU pass accumulates weighted feature sums and the denominator row.
        out_ref[...] += jnp.dot(weighted, onehot,
                                preferred_element_type=jnp.float32)  # [Fx+1, b_tile]

        @pl.when(ni == pl.num_programs(1) - 1)
        def _finalize():
            acc = out_ref[...]
            denom = acc[fx:fx + 1, :] + 1e-16                      # [1, b_tile]
            out_ref[...] = acc / denom

    return kernel


@functools.partial(jax.jit, static_argnames=("batch_size", "n_tile", "b_tile"))
def attention_forward(x, ref, index, batch_size, weight, bias,
                      *, n_tile=1024, b_tile=256):
    """x: [N, Fx], ref: [N, Fr], index: [N] int, weight: [1, Fx+Fr], bias: [1] -> [batch_size, Fx]."""
    N, Fx = x.shape
    Fr = ref.shape[1]

    w = weight.astype(jnp.float32)
    # Fold the bias into the weight entry that multiplies the appended ones row of x^T.
    wx_aug = jnp.concatenate(
        [w[:, :Fx], bias.astype(jnp.float32).reshape(1, 1)], axis=1)       # [1, Fx+1]
    wr = w[:, Fx:]                                                          # [1, Fr]

    # Transposed (feature-on-sublane, node-on-lane) inputs; the ones row makes the
    # softmax denominator one extra row of the fused matmul.  No zero-padding along N.
    xaT = jnp.concatenate(
        [x.astype(jnp.float32).T, jnp.ones((1, N), jnp.float32)], axis=0)   # [Fx+1, N]
    rT = ref.astype(jnp.float32).T                                          # [Fr, N]
    idx_col = index.astype(jnp.int32).reshape(N, 1)                         # [N, 1]

    # Node tile: multiple of 128 lanes.  Batch tile: multiple of 128 lanes (lane-dense
    # output); small batches collapse to a single B tile.  (On v7x, pass a smaller
    # b_tile for moderate batch sizes so grid[0] >= 2 and both TensorCores are used.)
    n_tile = _round_up(min(n_tile, _round_up(N, 128)), 128)
    num_n_tiles = pl.cdiv(N, n_tile)
    b_tile = _round_up(min(b_tile, _round_up(batch_size, 128)), 128)
    b_pad = _round_up(batch_size, b_tile)
    num_b_tiles = b_pad // b_tile

    kernel = _make_attention_kernel(N, n_tile, b_tile, Fx)

    outT = pl.pallas_call(
        kernel,
        out_shape=jax.ShapeDtypeStruct((Fx + 1, b_pad), jnp.float32),
        grid_spec=pltpu.PrefetchScalarGridSpec(
            num_scalar_prefetch=0,
            grid=(num_b_tiles, num_n_tiles),
            in_specs=[
                pl.BlockSpec((Fx + 1, n_tile), lambda bi, ni: (0, ni)),  # x^T (+ ones row)
                pl.BlockSpec((Fr, n_tile), lambda bi, ni: (0, ni)),      # ref^T
                pl.BlockSpec((n_tile, 1), lambda bi, ni: (ni, 0)),       # index column
                pl.BlockSpec((1, Fx + 1), lambda bi, ni: (0, 0)),        # [w_x, bias] (resident)
                pl.BlockSpec((1, Fr), lambda bi, ni: (0, 0)),            # w_ref (resident)
            ],
            out_specs=pl.BlockSpec((Fx + 1, b_tile), lambda bi, ni: (0, bi)),
            scratch_shapes=[pltpu.VMEM((n_tile, b_tile), jnp.int32)],    # cached lane-iota
        ),
        compiler_params=pltpu.CompilerParams(
            dimension_semantics=("parallel", "arbitrary")),
    )(xaT, rT, idx_col, wx_aug, wr)

    # Rows 0..Fx-1 are the pooled features, row Fx the denominator; padded batch rows are 0.
    return outT[:Fx, :batch_size].T


def attention_reference(x, ref, index, batch_size, weight, bias):
    src = jnp.tanh(jnp.concatenate([x, ref], -1) @ weight.T + bias)        # [N, 1]
    src_max = jax.ops.segment_max(src, index, num_segments=batch_size)
    src_max = jnp.where(jnp.isfinite(src_max), src_max, 0.0)
    out = jnp.exp(src - src_max[index])
    out_sum = jax.ops.segment_sum(out, index, num_segments=batch_size) + 1e-16
    w = out / out_sum[index]
    return jax.ops.segment_sum(w * x, index, num_segments=batch_size)


def _run_case(key, N, Fx, Fr, B, **tile_kwargs):
    k_x, k_r, k_i, k_w, k_b = jax.random.split(key, 5)
    x = jax.random.normal(k_x, (N, Fx), dtype=jnp.float32)
    ref = jax.random.normal(k_r, (N, Fr), dtype=jnp.float32)
    index = jax.random.randint(k_i, (N,), 0, B, dtype=jnp.int32)
    weight = jax.random.normal(k_w, (1, Fx + Fr), dtype=jnp.float32) * 0.1
    bias = jax.random.normal(k_b, (1,), dtype=jnp.float32) * 0.1

    out = attention_forward(x, ref, index, batch_size=B, weight=weight, bias=bias,
                            **tile_kwargs)
    out = jax.block_until_ready(out)
    expected = attention_reference(x, ref, index, B, weight, bias)
    assert out.shape == (B, Fx), (out.shape, (B, Fx))
    assert jnp.allclose(out, expected, atol=1e-5, rtol=1e-5), (out, expected)


if __name__ == "__main__":
    key = jax.random.PRNGKey(0)
    k1, k2, k3 = jax.random.split(key, 3)

    # Single N tile, single B tile; exercises ragged-tail masking (N=16 < n_tile=128).
    _run_case(k1, N=16, Fx=8, Fr=8, B=4)

    # Multi-N-tile accumulation + ragged tail on the last tile.
    _run_case(k2, N=300, Fx=8, Fr=8, B=10, n_tile=128)

    # Multiple B tiles (exercises the bi offset in the one-hot), Fr != Fx, non-8 Fx.
    _run_case(k3, N=512, Fx=4, Fr=6, B=200, n_tile=128, b_tile=128)

    print("KERNEL_OK")
</pallas_src>

<mosaic_0001>
module attributes {stable_mosaic.version = 11 : i64} {
  func.func @kernel(%arg0: i32, %arg1: i32, %arg2: memref<9x128xf32, #tpu.memory_space<vmem>>, %arg3: memref<8x128xf32, #tpu.memory_space<vmem>>, %arg4: memref<128x1xi32, #tpu.memory_space<vmem>>, %arg5: memref<1x9xf32, #tpu.memory_space<vmem>>, %arg6: memref<1x8xf32, #tpu.memory_space<vmem>>, %arg7: memref<9x128xf32, #tpu.memory_space<vmem>>, %arg8: memref<128x128xi32, #tpu.memory_space<vmem>>) attributes {dimension_semantics = [#tpu.dimension_semantics<parallel>, #tpu.dimension_semantics<arbitrary>], iteration_bounds = array<i64: 1, 1>, scalar_prefetch = 0 : i64, scratch_operands = 1 : i64, tpu.core_type = #tpu.core_type<tc>, window_params = [{transform_indices = @transform_0, window_bounds = array<i64: 9, 128>}, {transform_indices = @transform_1, window_bounds = array<i64: 8, 128>}, {transform_indices = @transform_2, window_bounds = array<i64: 128, 1>}, {pipeline_mode = #tpu.pipeline_mode<synchronous>, transform_indices = @transform_3, window_bounds = array<i64: 1, 9>}, {pipeline_mode = #tpu.pipeline_mode<synchronous>, transform_indices = @transform_4, window_bounds = array<i64: 1, 8>}, {transform_indices = @transform_5, window_bounds = array<i64: 9, 128>}]} {
    %c0_i32 = arith.constant 0 : i32
    %0 = arith.cmpi eq, %arg1, %c0_i32 : i32
    %1 = arith.extui %0 : i1 to i32
    %c0_i32_0 = arith.constant 0 : i32
    %2 = arith.cmpi ne, %1, %c0_i32_0 : i32
    scf.if %2 {
      %cst_22 = arith.constant 0.000000e+00 : f32
      %40 = vector.broadcast %cst_22 : f32 to vector<9x128xf32>
      %c0_23 = arith.constant 0 : index
      %c0_24 = arith.constant 0 : index
      %41 = vector.load %arg7[%c0_23, %c0_24] : memref<9x128xf32, #tpu.memory_space<vmem>>, vector<9x128xf32>
      tpu.vector_store %arg7[%c0_23, %c0_24], %40 {strides = array<i32>} : memref<9x128xf32, #tpu.memory_space<vmem>>, vector<9x128xf32>,
      %42 = tpu.iota {dimensions = array<i32: 1>} : vector<128x128xi32>
      %c0_25 = arith.constant 0 : index
      %c0_26 = arith.constant 0 : index
      %43 = vector.load %arg8[%c0_25, %c0_26] : memref<128x128xi32, #tpu.memory_space<vmem>>, vector<128x128xi32>
      tpu.vector_store %arg8[%c0_25, %c0_26], %42 {strides = array<i32>} : memref<128x128xi32, #tpu.memory_space<vmem>>, vector<128x128xi32>,
    } else {
    }
    %c0 = arith.constant 0 : index
    %c0_1 = arith.constant 0 : index
    %3 = vector.load %arg2[%c0, %c0_1] : memref<9x128xf32, #tpu.memory_space<vmem>>, vector<9x128xf32>
    %c0_2 = arith.constant 0 : index
    %c0_3 = arith.constant 0 : index
    %4 = vector.load %arg5[%c0_2, %c0_3] : memref<1x9xf32, #tpu.memory_space<vmem>>, vector<1x9xf32>
    %cst = arith.constant dense<0.000000e+00> : vector<1x128xf32>
    %5 = tpu.matmul %4, %3, %cst {dimension_numbers = #tpu.dot_dimension_numbers<[1], [0], [0], [1], [0, 0, 1, 1], [], []>} : vector<1x9xf32>, vector<9x128xf32>, vector<1x128xf32> -> vector<1x128xf32>
    %c0_4 = arith.constant 0 : index
    %c0_5 = arith.constant 0 : index
    %6 = vector.load %arg6[%c0_4, %c0_5] : memref<1x8xf32, #tpu.memory_space<vmem>>, vector<1x8xf32>
    %c0_6 = arith.constant 0 : index
    %c0_7 = arith.constant 0 : index
    %7 = vector.load %arg3[%c0_6, %c0_7] : memref<8x128xf32, #tpu.memory_space<vmem>>, vector<8x128xf32>
    %cst_8 = arith.constant dense<0.000000e+00> : vector<1x128xf32>
    %8 = tpu.matmul %6, %7, %cst_8 {dimension_numbers = #tpu.dot_dimension_numbers<[1], [0], [0], [1], [0, 0, 1, 1], [], []>} : vector<1x8xf32>, vector<8x128xf32>, vector<1x128xf32> -> vector<1x128xf32>
    %9 = arith.addf %5, %8 : vector<1x128xf32>
    %10 = math.tanh %9 : vector<1x128xf32>
    %11 = math.exp %10 : vector<1x128xf32>
    %12 = vector.broadcast %11 : vector<1x128xf32> to vector<9x128xf32>
    %13 = arith.mulf %12, %3 : vector<9x128xf32>
    %14 = tpu.iota {dimensions = array<i32: 1>} : vector<1x128xi32>
    %c128_i32 = arith.constant 128 : i32
    %15 = arith.muli %arg1, %c128_i32 : i32
    %16 = vector.broadcast %15 : i32 to vector<1x128xi32>
    %17 = arith.addi %14, %16 : vector<1x128xi32>
    %c16_i32 = arith.constant 16 : i32
    %18 = vector.broadcast %c16_i32 : i32 to vector<1x128xi32>
    %19 = arith.cmpi slt, %17, %18 : vector<1x128xi32>
    %cst_9 = arith.constant 0.000000e+00 : f32
    %20 = vector.shape_cast %19 : vector<1x128xi1> to vector<1x128xi1>
    %21 = vector.broadcast %20 : vector<1x128xi1> to vector<9x128xi1>
    %22 = vector.broadcast %cst_9 : f32 to vector<9x128xf32>
    %23 = arith.select %21, %13, %22 : vector<9x128xi1>, vector<9x128xf32>
    %c0_10 = arith.constant 0 : index
    %c0_11 = arith.constant 0 : index
    %24 = vector.load %arg4[%c0_10, %c0_11] : memref<128x1xi32, #tpu.memory_space<vmem>>, vector<128x1xi32>
    %c128_i32_12 = arith.constant 128 : i32
    %25 = arith.muli %arg0, %c128_i32_12 : i32
    %26 = vector.broadcast %25 : i32 to vector<128x1xi32>
    %27 = arith.subi %24, %26 : vector<128x1xi32>
    %c0_13 = arith.constant 0 : index
    %c0_14 = arith.constant 0 : index
    %28 = vector.load %arg8[%c0_13, %c0_14] : memref<128x128xi32, #tpu.memory_space<vmem>>, vector<128x128xi32>
    %29 = vector.broadcast %27 : vector<128x1xi32> to vector<128x128xi32>
    %30 = arith.cmpi eq, %28, %29 : vector<128x128xi32>
    %31 = arith.extui %30 : vector<128x128xi1> to vector<128x128xi32>
    %32 = arith.sitofp %31 : vector<128x128xi32> to vector<128x128xf32>
    %c0_15 = arith.constant 0 : index
    %c0_16 = arith.constant 0 : index
    %33 = vector.load %arg7[%c0_15, %c0_16] : memref<9x128xf32, #tpu.memory_space<vmem>>, vector<9x128xf32>
    %cst_17 = arith.constant dense<0.000000e+00> : vector<9x128xf32>
    %34 = tpu.matmul %23, %32, %cst_17 {dimension_numbers = #tpu.dot_dimension_numbers<[1], [0], [0], [1], [0, 0, 1, 1], [], []>} : vector<9x128xf32>, vector<128x128xf32>, vector<9x128xf32> -> vector<9x128xf32>
    %35 = arith.addf %33, %34 : vector<9x128xf32>
    %c0_18 = arith.constant 0 : index
    %c0_19 = arith.constant 0 : index
    %36 = vector.load %arg7[%c0_18, %c0_19] : memref<9x128xf32, #tpu.memory_space<vmem>>, vector<9x128xf32>
    tpu.vector_store %arg7[%c0_18, %c0_19], %35 {strides = array<i32>} : memref<9x128xf32, #tpu.memory_space<vmem>>, vector<9x128xf32>,
    %c0_i32_20 = arith.constant 0 : i32
    %37 = arith.cmpi eq, %arg1, %c0_i32_20 : i32
    %38 = arith.extui %37 : i1 to i32
    %c0_i32_21 = arith.constant 0 : i32
    %39 = arith.cmpi ne, %38, %c0_i32_21 : i32
    scf.if %39 {
      %c0_22 = arith.constant 0 : index
      %c0_23 = arith.constant 0 : index
      %40 = vector.load %arg7[%c0_22, %c0_23] : memref<9x128xf32, #tpu.memory_space<vmem>>, vector<9x128xf32>
      %41 = vector.extract_strided_slice %40 {offsets = [8, 0], sizes = [1, 128], strides = [1, 1]} : vector<9x128xf32> to vector<1x128xf32>
      %cst_24 = arith.constant 1.000000e-16 : f32
      %42 = vector.broadcast %cst_24 : f32 to vector<1x128xf32>
      %43 = arith.addf %41, %42 : vector<1x128xf32>
      %44 = vector.broadcast %43 : vector<1x128xf32> to vector<9x128xf32>
      %45 = arith.divf %40, %44 : vector<9x128xf32>
      %c0_25 = arith.constant 0 : index
      %c0_26 = arith.constant 0 : index
      %46 = vector.load %arg7[%c0_25, %c0_26] : memref<9x128xf32, #tpu.memory_space<vmem>>, vector<9x128xf32>
      tpu.vector_store %arg7[%c0_25, %c0_26], %45 {strides = array<i32>} : memref<9x128xf32, #tpu.memory_space<vmem>>, vector<9x128xf32>,
    } else {
    }
    return
  }
  func.func @transform_0(%arg0: i32, %arg1: i32) -> (i32, i32) {
    %c0_i32 = arith.constant 0 : i32
    %c0_i32_0 = arith.constant 0 : i32
    return %c0_i32, %arg1 : i32, i32
  }
  func.func @transform_1(%arg0: i32, %arg1: i32) -> (i32, i32) {
    %c0_i32 = arith.constant 0 : i32
    %c0_i32_0 = arith.constant 0 : i32
    return %c0_i32, %arg1 : i32, i32
  }
  func.func @transform_2(%arg0: i32, %arg1: i32) -> (i32, i32) {
    %c0_i32 = arith.constant 0 : i32
    %c0_i32_0 = arith.constant 0 : i32
    return %arg1, %c0_i32 : i32, i32
  }
  func.func @transform_3(%arg0: i32, %arg1: i32) -> (i32, i32) {
    %c0_i32 = arith.constant 0 : i32
    %c0_i32_0 = arith.constant 0 : i32
    %c0_i32_1 = arith.constant 0 : i32
    return %c0_i32, %c0_i32_0 : i32, i32
  }
  func.func @transform_4(%arg0: i32, %arg1: i32) -> (i32, i32) {
    %c0_i32 = arith.constant 0 : i32
    %c0_i32_0 = arith.constant 0 : i32
    %c0_i32_1 = arith.constant 0 : i32
    return %c0_i32, %c0_i32_0 : i32, i32
  }
  func.func @transform_5(%arg0: i32, %arg1: i32) -> (i32, i32) {
    %c0_i32 = arith.constant 0 : i32
    %c0_i32_0 = arith.constant 0 : i32
    return %c0_i32, %arg0 : i32, i32
  }
}

</mosaic_0001>

<llo_original>
// kernel: attention_forward.1
$region0: #{attention_forward.1}
  #allocation0 [shape = 'u32[]', space=smem, size = 0x4, offset = 0x4, fixed_abs, tag = 'smem constant byte address 0x4 - core index']
  #allocation1 [shape = 'u32[144,128]{1,0:T(1,128)}', space=vmem, size = 0x12000, scoped, tag = 'internal scratch']
  #allocation2 [shape = 's32[128,128]{1,0:T(8,128)}', space=vmem, size = 0x10000, scoped, tag = 'scratch operand']
  %s0 = inlined_call_operand.vmem [shape: f32[9,16], index: 0, kind: input, shape index: {}]
  %s1 = inlined_call_operand.vmem [shape: f32[8,16], index: 1, kind: input, shape index: {}]
  %s2 = inlined_call_operand.vmem [shape: s32[16,1], index: 2, kind: input, shape index: {}]
  %s3 = inlined_call_operand.vmem [shape: f32[1,9], index: 3, kind: input, shape index: {}]
  %s4 = inlined_call_operand.vmem [shape: f32[1,8], index: 4, kind: input, shape index: {}]
  %s5 = inlined_call_operand.vmem [shape: f32[9,128], index: 5, kind: output, shape index: {}]
  %s6 = sld [smem:[#allocation0]]
  $region38: #{attention_forward.1} parent=0
    _
  %s8 = ssub.s32 1, %s6
  %s9 = scalar_select 0, %s8, %s6
  // Predicated region
  $region2: #{attention_forward.1} parent=0 // pred_check
    _
  $region3: #{attention_forward.1} parent=0 // pred_check_branch
    %11 = sbr.rel (0) target = $region5
  $region4: #{attention_forward.1} parent=0 // pred_region
    _
  $region5: #{attention_forward.1} parent=0 // pred_fallthru
    _
  // Predicated region
  $region6: #{attention_forward.1} parent=0 // pred_check
    _
  $region7: #{attention_forward.1} parent=0 // pred_check_branch
    %13 = sbr.rel (0) target = $region9
  $region8: #{attention_forward.1} parent=0 // pred_region
    _
  $region9: #{attention_forward.1} parent=0 // pred_fallthru
    _
  // Predicated region
  $region10: #{attention_forward.1} parent=0 // pred_check
    _
  $region11: #{attention_forward.1} parent=0 // pred_check_branch
    %15 = sbr.rel (0) target = $region13
  $region12: #{attention_forward.1} parent=0 // pred_region
    _
  $region13: #{attention_forward.1} parent=0 // pred_fallthru
    _
  // Predicated region
  $region14: #{attention_forward.1} parent=0 // pred_check
    _
  $region15: #{attention_forward.1} parent=0 // pred_check_branch
    %17 = sbr.rel (0) target = $region17
  $region16: #{attention_forward.1} parent=0 // pred_region
    _
  $region17: #{attention_forward.1} parent=0 // pred_fallthru
    _
  // Predicated region
  $region18: #{attention_forward.1} parent=0 // pred_check
    _
  $region19: #{attention_forward.1} parent=0 // pred_check_branch
    %19 = sbr.rel (0) target = $region21
  $region20: #{attention_forward.1} parent=0 // pred_region
    _
  $region21: #{attention_forward.1} parent=0 // pred_fallthru
    _
  %p20 = scmp.eq.s32.totalorder 0, 0
  // Predicated region
  $region22: #{attention_forward.1} parent=0 // pred_check
    %p21 = pneg %p20
  $region23: #{attention_forward.1} parent=0 // pred_check_branch
    %23 = sbr.rel (%p21) target = $region25
  $region24: #{attention_forward.1} parent=0 // pred_region
    %24 = vst [vmem:[%s5] sm:$0xff] 0.0
    %25 = vst [vmem:[%s5 + $0x8] sm:$0x1] 0.0
    %v26 = vlaneseq
    %v27 = vand.u32 %v26, 127
    %28 = vst [vmem:[#allocation2] sm:$0xff] %v27
    %29 = vst [vmem:[#allocation2 + $0x8] sm:$0xff] %v27
    %30 = vst [vmem:[#allocation2 + $0x10] sm:$0xff] %v27
    %31 = vst [vmem:[#allocation2 + $0x18] sm:$0xff] %v27
    %32 = vst [vmem:[#allocation2 + $0x20] sm:$0xff] %v27
    %33 = vst [vmem:[#allocation2 + $0x28] sm:$0xff] %v27
    %34 = vst [vmem:[#allocation2 + $0x30] sm:$0xff] %v27
    %35 = vst [vmem:[#allocation2 + $0x38] sm:$0xff] %v27
    %36 = vst [vmem:[#allocation2 + $0x40] sm:$0xff] %v27
    %37 = vst [vmem:[#allocation2 + $0x48] sm:$0xff] %v27
    %38 = vst [vmem:[#allocation2 + $0x50] sm:$0xff] %v27
    %39 = vst [vmem:[#allocation2 + $0x58] sm:$0xff] %v27
    %40 = vst [vmem:[#allocation2 + $0x60] sm:$0xff] %v27
    %41 = vst [vmem:[#allocation2 + $0x68] sm:$0xff] %v27
    %42 = vst [vmem:[#allocation2 + $0x70] sm:$0xff] %v27
    %43 = vst [vmem:[#allocation2 + $0x78] sm:$0xff] %v27
  $region25: #{attention_forward.1} parent=0 // pred_fallthru
    _
  %v44 = vld [vmem:[%s0] sm:$0xff]
  %v45 = vld [vmem:[%s0 + $0x8] sm:$0x1]
  %v46 = vld [vmem:[%s3] sm:$0x1]
  %v47 = vld [vmem:[%s4] sm:$0x1]
  %v48 = vld [vmem:[%s1] sm:$0xff]
  %vm49 = vcmask 64512
  %v51 = vsel %vm49, %v47, 0
  %53 = vmatprep.subr.mxu0 0.0
  %54 = vmatpush1.msra.mxu0 %v48
  %55 = vmatprep.subr.mxu0 0.0
  %56 = vmatpush1.msra.mxu0 0.0
  %57 = vmatprep.subr.mxu0 0.0
  %58 = vmatpush1.msra.mxu0 0.0
  %59 = vmatprep.subr.mxu0 0.0
  %60 = vmatpush1.msra.mxu0 0.0
  %61 = vmatprep.subr.mxu0 0.0
  %62 = vmatpush1.msra.mxu0 0.0
  %63 = vmatprep.subr.mxu0 0.0
  %64 = vmatpush1.msra.mxu0 0.0
  %65 = vmatprep.subr.mxu0 0.0
  %66 = vmatpush1.msra.mxu0 0.0
  %67 = vmatprep.subr.mxu0 0.0
  %68 = vmatpush1.msra.mxu0 0.0
  %69 = vmatprep.subr.mxu0 0.0
  %70 = vmatpush1.msra.mxu0 0.0
  %71 = vmatprep.subr.mxu0 0.0
  %72 = vmatpush1.msra.mxu0 0.0
  %73 = vmatprep.subr.mxu0 0.0
  %74 = vmatpush1.msra.mxu0 0.0
  %75 = vmatprep.subr.mxu0 0.0
  %76 = vmatpush1.msra.mxu0 0.0
  %77 = vmatprep.subr.mxu0 0.0
  %78 = vmatpush1.msra.mxu0 0.0
  %79 = vmatprep.subr.mxu0 0.0
  %80 = vmatpush1.msra.mxu0 0.0
  %81 = vmatprep.subr.mxu0 0.0
  %82 = vmatpush1.msra.mxu0 0.0
  %83 = vmatprep.subr.mxu0 0.0
  %84 = vmatpush1.msra.mxu0 0.0
  %85 = vmatprep.subr.mxu0 0.0
  %86 = vmatpush1.msra.mxu0 0.0
  %87 = vmatprep.subr.mxu0 0.0
  %88 = vmatpush1.msra.mxu0 0.0
  %89 = vmatprep.subr.mxu0 0.0
  %90 = vmatpush1.msra.mxu0 0.0
  %91 = vmatprep.subr.mxu0 0.0
  %92 = vmatpush1.msra.mxu0 0.0
  %93 = vmatprep.subr.mxu0 0.0
  %94 = vmatpush1.msra.mxu0 0.0
  %95 = vmatprep.subr.mxu0 0.0
  %96 = vmatpush1.msra.mxu0 0.0
  %97 = vmatprep.subr.mxu0 0.0
  %98 = vmatpush1.msra.mxu0 0.0
  %99 = vmatprep.subr.mxu0 0.0
  %100 = vmatpush1.msra.mxu0 0.0
  %101 = vmatprep.subr.mxu0 0.0
  %102 = vmatpush1.msra.mxu0 0.0
  %103 = vmatprep.subr.mxu0 0.0
  %104 = vmatpush1.msra.mxu0 0.0
  %105 = vmatprep.subr.mxu0 0.0
  %106 = vmatpush1.msra.mxu0 0.0
  %107 = vmatprep.subr.mxu0 0.0
  %108 = vmatpush1.msra.mxu0 0.0
  %109 = vmatprep.subr.mxu0 0.0
  %110 = vmatpush1.msra.mxu0 0.0
  %111 = vmatprep.subr.mxu0 0.0
  %112 = vmatpush1.msra.mxu0 0.0
  %113 = vmatprep.subr.mxu0 0.0
  %114 = vmatpush1.msra.mxu0 0.0
  %115 = vmatprep.subr.mxu0 0.0
  %116 = vmatpush1.msra.mxu0 0.0
  %117 = vmatprep.mubr.f32.mxu0 0.0
  %118 = vmatmul.mubr.f32.gmra.mrb[0].mxu0 %v51
  %v119 = vpop.f32.mrb[0].mxu0
  %v120 = vadd.f32 0.0, %v119
  %v121 = vpop.f32.mrb[0].mxu0
  %122 = vdwg.mxu0
  %vm123 = vcmask 72704
  %v125 = vsel %vm123, %v46, 0
  %vm127 = vcmask 1040384
  %v129 = vsel %vm127, %v45, 0
  %131 = vmatprep.subr.mxu0 0.0
  %132 = vmatpush1.msra.mxu0 %v44
  %133 = vmatprep.subr.mxu0 0.0
  %134 = vmatpush1.msra.mxu0 %v129
  %135 = vmatprep.subr.mxu0 0.0
  %136 = vmatpush1.msra.mxu0 0.0
  %137 = vmatprep.subr.mxu0 0.0
  %138 = vmatpush1.msra.mxu0 0.0
  %139 = vmatprep.subr.mxu0 0.0
  %140 = vmatpush1.msra.mxu0 0.0
  %141 = vmatprep.subr.mxu0 0.0
  %142 = vmatpush1.msra.mxu0 0.0
  %143 = vmatprep.subr.mxu0 0.0
  %144 = vmatpush1.msra.mxu0 0.0
  %145 = vmatprep.subr.mxu0 0.0
  %146 = vmatpush1.msra.mxu0 0.0
  %147 = vmatprep.subr.mxu0 0.0
  %148 = vmatpush1.msra.mxu0 0.0
  %149 = vmatprep.subr.mxu0 0.0
  %150 = vmatpush1.msra.mxu0 0.0
  %151 = vmatprep.subr.mxu0 0.0
  %152 = vmatpush1.msra.mxu0 0.0
  %153 = vmatprep.subr.mxu0 0.0
  %154 = vmatpush1.msra.mxu0 0.0
  %155 = vmatprep.subr.mxu0 0.0
  %156 = vmatpush1.msra.mxu0 0.0
  %157 = vmatprep.subr.mxu0 0.0
  %158 = vmatpush1.msra.mxu0 0.0
  %159 = vmatprep.subr.mxu0 0.0
  %160 = vmatpush1.msra.mxu0 0.0
  %161 = vmatprep.subr.mxu0 0.0
  %162 = vmatpush1.msra.mxu0 0.0
  %163 = vmatprep.subr.mxu0 0.0
  %164 = vmatpush1.msra.mxu0 0.0
  %165 = vmatprep.subr.mxu0 0.0
  %166 = vmatpush1.msra.mxu0 0.0
  %167 = vmatprep.subr.mxu0 0.0
  %168 = vmatpush1.msra.mxu0 0.0
  %169 = vmatprep.subr.mxu0 0.0
  %170 = vmatpush1.msra.mxu0 0.0
  %171 = vmatprep.subr.mxu0 0.0
  %172 = vmatpush1.msra.mxu0 0.0
  %173 = vmatprep.subr.mxu0 0.0
  %174 = vmatpush1.msra.mxu0 0.0
  %175 = vmatprep.subr.mxu0 0.0
  %176 = vmatpush1.msra.mxu0 0.0
  %177 = vmatprep.subr.mxu0 0.0
  %178 = vmatpush1.msra.mxu0 0.0
  %179 = vmatprep.subr.mxu0 0.0
  %180 = vmatpush1.msra.mxu0 0.0
  %181 = vmatprep.subr.mxu0 0.0
  %182 = vmatpush1.msra.mxu0 0.0
  %183 = vmatprep.subr.mxu0 0.0
  %184 = vmatpush1.msra.mxu0 0.0
  %185 = vmatprep.subr.mxu0 0.0
  %186 = vmatpush1.msra.mxu0 0.0
  %187 = vmatprep.subr.mxu0 0.0
  %188 = vmatpush1.msra.mxu0 0.0
  %189 = vmatprep.subr.mxu0 0.0
  %190 = vmatpush1.msra.mxu0 0.0
  %191 = vmatprep.subr.mxu0 0.0
  %192 = vmatpush1.msra.mxu0 0.0
  %193 = vmatprep.subr.mxu0 0.0
  %194 = vmatpush1.msra.mxu0 0.0
  %195 = vmatprep.mubr.f32.mxu0 0.0
  %196 = vmatmul.mubr.f32.gmra.mrb[0].mxu0 %v125
  %v197 = vpop.f32.mrb[0].mxu0
  %v198 = vadd.f32 %v120, %v197
  %v199 = vpop.f32.mrb[0].mxu0
  %200 = vdwg.mxu0
  %v201 = vtanh.pop %v198
  %v202 = vmul.f32 %v201, 1.442695
  %v203 = vpow.pop %v202
  %v204 = vlaneseq
  %v205 = vshrl.u32 %v204, 7
  %v206 = vsub.s32 0, %v205
  %v207 = vrot.slane %v203, %v206
  %v208 = vmul.f32 %v207, %v44
  %v209 = vmul.f32 %v207, %v45
  %v210 = vlaneseq
  %v211 = vand.u32 %v210, 127
  %s212 = smul.u32 0, 128
  %v213 = vstv %s212
  %v214 = vadd.s32 %v211, %v213
  %vm215 = vcmp.lt.s32.totalorder %v214, 16
  %v216 = vsel %vm215, 1, 0
  %vm217 = vcmp.eq.s32.totalorder %v216, 1
  %v218 = vsel %vm217, %v208, 0.0
  %v219 = vsel %vm217, %v209, 0.0
  %v220 = vld [vmem:[%s2] sm:$0xff]
  %v221 = vld [vmem:[%s2 + $0x8] sm:$0xff]
  %v222 = vld [vmem:[%s2 + $0x10] sm:$0xff]
  %v223 = vld [vmem:[%s2 + $0x18] sm:$0xff]
  %v224 = vld [vmem:[%s2 + $0x20] sm:$0xff]
  %v225 = vld [vmem:[%s2 + $0x28] sm:$0xff]
  %v226 = vld [vmem:[%s2 + $0x30] sm:$0xff]
  %v227 = vld [vmem:[%s2 + $0x38] sm:$0xff]
  %v228 = vld [vmem:[%s2 + $0x40] sm:$0xff]
  %v229 = vld [vmem:[%s2 + $0x48] sm:$0xff]
  %v230 = vld [vmem:[%s2 + $0x50] sm:$0xff]
  %v231 = vld [vmem:[%s2 + $0x58] sm:$0xff]
  %v232 = vld [vmem:[%s2 + $0x60] sm:$0xff]
  %v233 = vld [vmem:[%s2 + $0x68] sm:$0xff]
  %v234 = vld [vmem:[%s2 + $0x70] sm:$0xff]
  %v235 = vld [vmem:[%s2 + $0x78] sm:$0xff]
  %s236 = smul.u32 0, 128
  %v237 = vstv %s236
  %v238 = vsub.s32 %v220, %v237
  %v239 = vsub.s32 %v221, %v237
  %v240 = vsub.s32 %v222, %v237
  %v241 = vsub.s32 %v223, %v237
  %v242 = vsub.s32 %v224, %v237
  %v243 = vsub.s32 %v225, %v237
  %v244 = vsub.s32 %v226, %v237
  %v245 = vsub.s32 %v227, %v237
  %v246 = vsub.s32 %v228, %v237
  %v247 = vsub.s32 %v229, %v237
  %v248 = vsub.s32 %v230, %v237
  %v249 = vsub.s32 %v231, %v237
  %v250 = vsub.s32 %v232, %v237
  %v251 = vsub.s32 %v233, %v237
  %v252 = vsub.s32 %v234, %v237
  %v253 = vsub.s32 %v235, %v237
  %v254 = vld [vmem:[#allocation2] sm:$0xff]
  %v255 = vld [vmem:[#allocation2 + $0x8] sm:$0xff]
  %v256 = vld [vmem:[#allocation2 + $0x10] sm:$0xff]
  %v257 = vld [vmem:[#allocation2 + $0x18] sm:$0xff]
  %v258 = vld [vmem:[#allocation2 + $0x20] sm:$0xff]
  %v259 = vld [vmem:[#allocation2 + $0x28] sm:$0xff]
  %v260 = vld [vmem:[#allocation2 + $0x30] sm:$0xff]
  %v261 = vld [vmem:[#allocation2 + $0x38] sm:$0xff]
  %v262 = vld [vmem:[#allocation2 + $0x40] sm:$0xff]
  %v263 = vld [vmem:[#allocation2 + $0x48] sm:$0xff]
  %v264 = vld [vmem:[#allocation2 + $0x50] sm:$0xff]
  %v265 = vld [vmem:[#allocation2 + $0x58] sm:$0xff]
  %v266 = vld [vmem:[#allocation2 + $0x60] sm:$0xff]
  %v267 = vld [vmem:[#allocation2 + $0x68] sm:$0xff]
  %v268 = vld [vmem:[#allocation2 + $0x70] sm:$0xff]
  %v269 = vld [vmem:[#allocation2 + $0x78] sm:$0xff]
  %270 = vset.pattern.permute.xlu0 0
  %271 = vperm.xlu0 %270, %v238
  %v272 = vpop.permute.xlu0 %271
  %273 = vset.pattern.permute.xlu0 0
  %274 = vperm.xlu0 %273, %v239
  %v275 = vpop.permute.xlu0 %274
  %276 = vset.pattern.permute.xlu0 0
  %277 = vperm.xlu0 %276, %v240
  %v278 = vpop.permute.xlu0 %277
  %279 = vset.pattern.permute.xlu0 0
  %280 = vperm.xlu0 %279, %v241
  %v281 = vpop.permute.xlu0 %280
  %282 = vset.pattern.permute.xlu0 0
  %283 = vperm.xlu0 %282, %v242
  %v284 = vpop.permute.xlu0 %283
  %285 = vset.pattern.permute.xlu0 0
  %286 = vperm.xlu0 %285, %v243
  %v287 = vpop.permute.xlu0 %286
  %288 = vset.pattern.permute.xlu0 0
  %289 = vperm.xlu0 %288, %v244
  %v290 = vpop.permute.xlu0 %289
  %291 = vset.pattern.permute.xlu0 0
  %292 = vperm.xlu0 %291, %v245
  %v293 = vpop.permute.xlu0 %292
  %294 = vset.pattern.permute.xlu0 0
  %295 = vperm.xlu0 %294, %v246
  %v296 = vpop.permute.xlu0 %295
  %297 = vset.pattern.permute.xlu0 0
  %298 = vperm.xlu0 %297, %v247
  %v299 = vpop.permute.xlu0 %298
  %300 = vset.pattern.permute.xlu0 0
  %301 = vperm.xlu0 %300, %v248
  %v302 = vpop.permute.xlu0 %301
  %303 = vset.pattern.permute.xlu0 0
  %304 = vperm.xlu0 %303, %v249
  %v305 = vpop.permute.xlu0 %304
  %306 = vset.pattern.permute.xlu0 0
  %307 = vperm.xlu0 %306, %v250
  %v308 = vpop.permute.xlu0 %307
  %309 = vset.pattern.permute.xlu0 0
  %310 = vperm.xlu0 %309, %v251
  %v311 = vpop.permute.xlu0 %310
  %312 = vset.pattern.permute.xlu0 0
  %313 = vperm.xlu0 %312, %v252
  %v314 = vpop.permute.xlu0 %313
  %315 = vset.pattern.permute.xlu0 0
  %316 = vperm.xlu0 %315, %v253
  %v317 = vpop.permute.xlu0 %316
  %vm318 = vcmp.eq.s32.totalorder %v254, %v272
  %vm319 = vcmp.eq.s32.totalorder %v255, %v275
  %vm320 = vcmp.eq.s32.totalorder %v256, %v278
  %vm321 = vcmp.eq.s32.totalorder %v257, %v281
  %vm322 = vcmp.eq.s32.totalorder %v258, %v284
  %vm323 = vcmp.eq.s32.totalorder %v259, %v287
  %vm324 = vcmp.eq.s32.totalorder %v260, %v290
  %vm325 = vcmp.eq.s32.totalorder %v261, %v293
  %vm326 = vcmp.eq.s32.totalorder %v262, %v296
  %vm327 = vcmp.eq.s32.totalorder %v263, %v299
  %vm328 = vcmp.eq.s32.totalorder %v264, %v302
  %vm329 = vcmp.eq.s32.totalorder %v265, %v305
  %vm330 = vcmp.eq.s32.totalorder %v266, %v308
  %vm331 = vcmp.eq.s32.totalorder %v267, %v311
  %vm332 = vcmp.eq.s32.totalorder %v268, %v314
  %vm333 = vcmp.eq.s32.totalorder %v269, %v317
  %v334 = vsel %vm318, 1, 0
  %v335 = vsel %vm319, 1, 0
  %v336 = vsel %vm320, 1, 0
  %v337 = vsel %vm321, 1, 0
  %v338 = vsel %vm322, 1, 0
  %v339 = vsel %vm323, 1, 0
  %v340 = vsel %vm324, 1, 0
  %v341 = vsel %vm325, 1, 0
  %v342 = vsel %vm326, 1, 0
  %v343 = vsel %vm327, 1, 0
  %v344 = vsel %vm328, 1, 0
  %v345 = vsel %vm329, 1, 0
  %v346 = vsel %vm330, 1, 0
  %v347 = vsel %vm331, 1, 0
  %v348 = vsel %vm332, 1, 0
  %v349 = vsel %vm333, 1, 0
  %v350 = vcvt.s32.f32 %v334
  %v351 = vcvt.s32.f32 %v335
  %v352 = vcvt.s32.f32 %v336
  %v353 = vcvt.s32.f32 %v337
  %v354 = vcvt.s32.f32 %v338
  %v355 = vcvt.s32.f32 %v339
  %v356 = vcvt.s32.f32 %v340
  %v357 = vcvt.s32.f32 %v341
  %v358 = vcvt.s32.f32 %v342
  %v359 = vcvt.s32.f32 %v343
  %v360 = vcvt.s32.f32 %v344
  %v361 = vcvt.s32.f32 %v345
  %v362 = vcvt.s32.f32 %v346
  %v363 = vcvt.s32.f32 %v347
  %v364 = vcvt.s32.f32 %v348
  %v365 = vcvt.s32.f32 %v349
  %v366 = vld [vmem:[%s5] sm:$0xff]
  %v367 = vld [vmem:[%s5 + $0x8] sm:$0x1]
  %368 = vmatprep.subr.mxu0 0.0
  %369 = vmatpush1.msra.mxu0 %v350
  %370 = vmatprep.subr.mxu0 0.0
  %371 = vmatpush1.msra.mxu0 %v351
  %372 = vmatprep.subr.mxu0 0.0
  %373 = vmatpush1.msra.mxu0 %v352
  %374 = vmatprep.subr.mxu0 0.0
  %375 = vmatpush1.msra.mxu0 %v353
  %376 = vmatprep.subr.mxu0 0.0
  %377 = vmatpush1.msra.mxu0 %v354
  %378 = vmatprep.subr.mxu0 0.0
  %379 = vmatpush1.msra.mxu0 %v355
  %380 = vmatprep.subr.mxu0 0.0
  %381 = vmatpush1.msra.mxu0 %v356
  %382 = vmatprep.subr.mxu0 0.0
  %383 = vmatpush1.msra.mxu0 %v357
  %384 = vmatprep.subr.mxu0 0.0
  %385 = vmatpush1.msra.mxu0 %v358
  %386 = vmatprep.subr.mxu0 0.0
  %387 = vmatpush1.msra.mxu0 %v359
  %388 = vmatprep.subr.mxu0 0.0
  %389 = vmatpush1.msra.mxu0 %v360
  %390 = vmatprep.subr.mxu0 0.0
  %391 = vmatpush1.msra.mxu0 %v361
  %392 = vmatprep.subr.mxu0 0.0
  %393 = vmatpush1.msra.mxu0 %v362
  %394 = vmatprep.subr.mxu0 0.0
  %395 = vmatpush1.msra.mxu0 %v363
  %396 = vmatprep.subr.mxu0 0.0
  %397 = vmatpush1.msra.mxu0 %v364
  %398 = vmatprep.subr.mxu0 0.0
  %399 = vmatpush1.msra.mxu0 %v365
  %400 = vmatprep.subr.mxu0 0.0
  %401 = vmatpush1.msra.mxu0 0.0
  %402 = vmatprep.subr.mxu0 0.0
  %403 = vmatpush1.msra.mxu0 0.0
  %404 = vmatprep.subr.mxu0 0.0
  %405 = vmatpush1.msra.mxu0 0.0
  %406 = vmatprep.subr.mxu0 0.0
  %407 = vmatpush1.msra.mxu0 0.0
  %408 = vmatprep.subr.mxu0 0.0
  %409 = vmatpush1.msra.mxu0 0.0
  %410 = vmatprep.subr.mxu0 0.0
  %411 = vmatpush1.msra.mxu0 0.0
  %412 = vmatprep.subr.mxu0 0.0
  %413 = vmatpush1.msra.mxu0 0.0
  %414 = vmatprep.subr.mxu0 0.0
  %415 = vmatpush1.msra.mxu0 0.0
  %416 = vmatprep.subr.mxu0 0.0
  %417 = vmatpush1.msra.mxu0 0.0
  %418 = vmatprep.subr.mxu0 0.0
  %419 = vmatpush1.msra.mxu0 0.0
  %420 = vmatprep.subr.mxu0 0.0
  %421 = vmatpush1.msra.mxu0 0.0
  %422 = vmatprep.subr.mxu0 0.0
  %423 = vmatpush1.msra.mxu0 0.0
  %424 = vmatprep.subr.mxu0 0.0
  %425 = vmatpush1.msra.mxu0 0.0
  %426 = vmatprep.subr.mxu0 0.0
  %427 = vmatpush1.msra.mxu0 0.0
  %428 = vmatprep.subr.mxu0 0.0
  %429 = vmatpush1.msra.mxu0 0.0
  %430 = vmatprep.subr.mxu0 0.0
  %431 = vmatpush1.msra.mxu0 0.0
  %432 = vmatprep.mubr.f32.mxu0 0.0
  %433 = vmatmul.mubr.f32.gmra.mrb[0].mxu0 %v218
  %v434 = vpop.f32.mrb[0].mxu0
  %v435 = vadd.f32 0.0, %v434
  %v436 = vpop.f32.mrb[0].mxu0
  %437 = vmatprep.mubr.f32.mxu0 0.0
  %438 = vmatmul.mubr.f32.gmra.mrb[0].mxu0 %v219
  %v439 = vpop.f32.mrb[0].mxu0
  %v440 = vadd.f32 0.0, %v439
  %v441 = vpop.f32.mrb[0].mxu0
  %442 = vdwg.mxu0
  %v443 = vadd.f32 %v366, %v435
  %v444 = vadd.f32 %v367, %v440
  %445 = vst [vmem:[%s5] sm:$0xff] %v443
  %446 = vst [vmem:[%s5 + $0x8] sm:$0x1] %v444
  // Predicated region
  $region26: #{attention_forward.1} parent=0 // pred_check
    %p447 = pneg %p20
  $region27: #{attention_forward.1} parent=0 // pred_check_branch
    %449 = sbr.rel (%p447) target = $region29
  $region28: #{attention_forward.1} parent=0 // pred_region
    %v450 = vld [vmem:[%s5] sm:$0xff]
    %v451 = vld [vmem:[%s5 + $0x8] sm:$0x1]
    %v452 = vadd.f32 %v451, 1e-16
    %v453 = vlaneseq
    %v454 = vshrl.u32 %v453, 7
    %v455 = vsub.s32 0, %v454
    %v456 = vrot.slane %v452, %v455
    %v457 = vrcp.pop %v456
    %v458 = vmul.f32 %v450, %v457
    %v459 = vmul.f32 %v451, %v457
    %460 = vst [vmem:[%s5] sm:$0xff] %v458
    %461 = vst [vmem:[%s5 + $0x8] sm:$0x1] %v459
  $region29: #{attention_forward.1} parent=0 // pred_fallthru
    _
  // Predicated region
  $region30: #{attention_forward.1} parent=0 // pred_check
    _
  $region31: #{attention_forward.1} parent=0 // pred_check_branch
    %463 = sbr.rel (0) target = $region33
  $region32: #{attention_forward.1} parent=0 // pred_region
    _
  $region33: #{attention_forward.1} parent=0 // pred_fallthru
    _
  // Predicated region
  $region34: #{attention_forward.1} parent=0 // pred_check
    _
  $region35: #{attention_forward.1} parent=0 // pred_check_branch
    %465 = sbr.rel (0) target = $region37
  $region36: #{attention_forward.1} parent=0 // pred_region
    _
  $region37: #{attention_forward.1} parent=0 // pred_fallthru
    _

</llo_original>
